<compile_context>
chip_gen: v7x
topology: tpu7x:2x2x1
jax: 0.10.0
libtpu: 0.0.40
codegen_flags: <defaults>
</compile_context>

<pallas_src>
import functools

import jax
import jax.numpy as jnp
from jax.experimental import pallas as pl
from jax.experimental.pallas import tpu as pltpu

input_size = 784
hidden_size = 100
output_size = 10

HIDDEN_PAD = 128   # 100 -> 128 (lane-dense intermediate)
OUT_PAD = 128      # 10  -> 128 (lane-dense, unmasked output stores)


def mlp_kernel(x_ref, w1_ref, b1_ref, w2_ref, b2_ref, o_ref):
    # fc1: (TB, 784) @ (784, 128) -> f32 accum
    h = jnp.dot(x_ref[...], w1_ref[...], preferred_element_type=jnp.float32)
    # bias + ReLU in f32 (v5e VPU has no bf16 elementwise)
    h = jnp.maximum(h + b1_ref[...], 0.0)
    # fc2: (TB, 128) @ (128, 128) -> f32 accum
    o = jnp.dot(h.astype(w2_ref.dtype), w2_ref[...],
                preferred_element_type=jnp.float32)
    o_ref[...] = (o + b2_ref[...]).astype(o_ref.dtype)


def prepare_params(w1, b1, w2, b2, compute_dtype=jnp.float32):
    """One-time repack of PyTorch-layout params into kernel layout.

    w1: (hidden, in), b1: (hidden,), w2: (out, hidden), b2: (out,)
    Returns zero-padded, pre-transposed params:
      w1_t: (in, HIDDEN_PAD), b1_p: (1, HIDDEN_PAD),
      w2_t: (HIDDEN_PAD, OUT_PAD), b2_p: (1, OUT_PAD)
    """
    w1_t = jnp.zeros((input_size, HIDDEN_PAD), compute_dtype)
    w1_t = w1_t.at[:, :hidden_size].set(w1.T.astype(compute_dtype))
    b1_p = jnp.zeros((1, HIDDEN_PAD), jnp.float32)
    b1_p = b1_p.at[:, :hidden_size].set(b1.astype(jnp.float32))
    w2_t = jnp.zeros((HIDDEN_PAD, OUT_PAD), compute_dtype)
    w2_t = w2_t.at[:hidden_size, :output_size].set(w2.T.astype(compute_dtype))
    b2_p = jnp.zeros((1, OUT_PAD), jnp.float32)
    b2_p = b2_p.at[:, :output_size].set(b2.astype(jnp.float32))
    return w1_t, b1_p, w2_t, b2_p


@functools.partial(jax.jit, static_argnames=("block_b",))
def net_forward(x, params, *, block_b=512):
    """Pallas forward pass.  x: (B, 784) f32 -> (B, 10) f32."""
    w1_t, b1_p, w2_t, b2_p = params
    compute_dtype = w1_t.dtype
    B = x.shape[0]

    # Batch tile: multiple of 8 (sublane), capped at block_b to bound VMEM
    # (block_b=512 -> x tile ~1.6 MiB f32, well under scoped VMEM everywhere).
    TB = min(block_b, max(8, ((B + 7) // 8) * 8))
    B_pad = pl.cdiv(B, TB) * TB
    if B_pad != B:
        x = jnp.pad(x, ((0, B_pad - B), (0, 0)))
    x = x.astype(compute_dtype)

    grid = (B_pad // TB,)
    bytes_per = jnp.dtype(compute_dtype).itemsize
    cost = pl.CostEstimate(
        flops=2 * B_pad * (input_size * HIDDEN_PAD + HIDDEN_PAD * OUT_PAD),
        transcendentals=0,
        bytes_accessed=(B_pad * input_size * bytes_per
                        + (input_size * HIDDEN_PAD + HIDDEN_PAD * OUT_PAD) * bytes_per
                        + B_pad * OUT_PAD * 4),
    )

    out = pl.pallas_call(
        mlp_kernel,
        out_shape=jax.ShapeDtypeStruct((B_pad, OUT_PAD), jnp.float32),
        grid=grid,
        in_specs=[
            # batch-tiled activations
            pl.BlockSpec((TB, input_size), lambda i: (i, 0)),
            # weights/biases resident across all batch tiles (block (0,0) always)
            pl.BlockSpec((input_size, HIDDEN_PAD), lambda i: (0, 0)),
            pl.BlockSpec((1, HIDDEN_PAD), lambda i: (0, 0)),
            pl.BlockSpec((HIDDEN_PAD, OUT_PAD), lambda i: (0, 0)),
            pl.BlockSpec((1, OUT_PAD), lambda i: (0, 0)),
        ],
        out_specs=pl.BlockSpec((TB, OUT_PAD), lambda i: (i, 0)),
        compiler_params=pltpu.CompilerParams(
            dimension_semantics=("parallel",)),
        cost_estimate=cost,
    )(x, w1_t, b1_p, w2_t, b2_p)

    # Slice away batch padding and the padded (zero) output lanes.
    return out[:B, :output_size]


def init_params(key):
    """Deterministic init mimicking nn.Linear default (uniform +/- 1/sqrt(fan_in))."""
    k1, k2, k3, k4 = jax.random.split(key, 4)
    bound1 = 1.0 / jnp.sqrt(jnp.float32(input_size))
    bound2 = 1.0 / jnp.sqrt(jnp.float32(hidden_size))
    w1 = jax.random.uniform(k1, (hidden_size, input_size), jnp.float32, -bound1, bound1)
    b1 = jax.random.uniform(k2, (hidden_size,), jnp.float32, -bound1, bound1)
    w2 = jax.random.uniform(k3, (output_size, hidden_size), jnp.float32, -bound2, bound2)
    b2 = jax.random.uniform(k4, (output_size,), jnp.float32, -bound2, bound2)
    return w1, b1, w2, b2


if __name__ == "__main__":
    key = jax.random.PRNGKey(0)
    kx, kp = jax.random.split(key)
    B = 8
    x = jax.random.normal(kx, (B, input_size), jnp.float32)
    w1, b1, w2, b2 = init_params(kp)

    # One-time repack (outside the per-call hot path).
    # For v6e/v7x bandwidth wins, pass compute_dtype=jnp.bfloat16 here
    # (and relax the tolerance below to ~2e-2).
    params = prepare_params(w1, b1, w2, b2, compute_dtype=jnp.float32)

    out = net_forward(x, params)
    out = jax.block_until_ready(out)

    # Pure-JAX reference of the same math (original PyTorch layout).
    ref = jnp.maximum(x @ w1.T + b1, 0.0) @ w2.T + b2
    assert out.shape == (B, output_size)
    assert jnp.allclose(out, ref, atol=1e-4, rtol=1e-4)

    print("KERNEL_OK")
</pallas_src>

<mosaic_0001>
module attributes {stable_mosaic.version = 11 : i64} {
  func.func @mlp_kernel(%arg0: i32, %arg1: memref<8x784xf32, #tpu.memory_space<vmem>>, %arg2: memref<784x128xf32, #tpu.memory_space<vmem>>, %arg3: memref<1x128xf32, #tpu.memory_space<vmem>>, %arg4: memref<128x128xf32, #tpu.memory_space<vmem>>, %arg5: memref<1x128xf32, #tpu.memory_space<vmem>>, %arg6: memref<8x128xf32, #tpu.memory_space<vmem>>) attributes {dimension_semantics = [#tpu.dimension_semantics<parallel>], iteration_bounds = array<i64: 1>, scalar_prefetch = 0 : i64, scratch_operands = 0 : i64, tpu.core_type = #tpu.core_type<tc>, window_params = [{transform_indices = @transform_0, window_bounds = array<i64: 8, 784>}, {pipeline_mode = #tpu.pipeline_mode<synchronous>, transform_indices = @transform_1, window_bounds = array<i64: 784, 128>}, {pipeline_mode = #tpu.pipeline_mode<synchronous>, transform_indices = @transform_2, window_bounds = array<i64: 1, 128>}, {pipeline_mode = #tpu.pipeline_mode<synchronous>, transform_indices = @transform_3, window_bounds = array<i64: 128, 128>}, {pipeline_mode = #tpu.pipeline_mode<synchronous>, transform_indices = @transform_4, window_bounds = array<i64: 1, 128>}, {transform_indices = @transform_5, window_bounds = array<i64: 8, 128>}]} {
    %c0 = arith.constant 0 : index
    %c0_0 = arith.constant 0 : index
    %0 = vector.load %arg1[%c0, %c0_0] : memref<8x784xf32, #tpu.memory_space<vmem>>, vector<8x784xf32>
    %c0_1 = arith.constant 0 : index
    %c0_2 = arith.constant 0 : index
    %1 = vector.load %arg2[%c0_1, %c0_2] : memref<784x128xf32, #tpu.memory_space<vmem>>, vector<784x128xf32>
    %cst = arith.constant dense<0.000000e+00> : vector<8x128xf32>
    %2 = tpu.matmul %0, %1, %cst {dimension_numbers = #tpu.dot_dimension_numbers<[1], [0], [0], [1], [0, 0, 1, 1], [], []>} : vector<8x784xf32>, vector<784x128xf32>, vector<8x128xf32> -> vector<8x128xf32>
    %c0_3 = arith.constant 0 : index
    %c0_4 = arith.constant 0 : index
    %3 = vector.load %arg3[%c0_3, %c0_4] : memref<1x128xf32, #tpu.memory_space<vmem>>, vector<1x128xf32>
    %4 = vector.broadcast %3 : vector<1x128xf32> to vector<8x128xf32>
    %5 = arith.addf %2, %4 : vector<8x128xf32>
    %cst_5 = arith.constant 0.000000e+00 : f32
    %6 = vector.broadcast %cst_5 : f32 to vector<8x128xf32>
    %7 = arith.maximumf %5, %6 : vector<8x128xf32>
    %c0_6 = arith.constant 0 : index
    %c0_7 = arith.constant 0 : index
    %8 = vector.load %arg4[%c0_6, %c0_7] : memref<128x128xf32, #tpu.memory_space<vmem>>, vector<128x128xf32>
    %cst_8 = arith.constant dense<0.000000e+00> : vector<8x128xf32>
    %9 = tpu.matmul %7, %8, %cst_8 {dimension_numbers = #tpu.dot_dimension_numbers<[1], [0], [0], [1], [0, 0, 1, 1], [], []>} : vector<8x128xf32>, vector<128x128xf32>, vector<8x128xf32> -> vector<8x128xf32>
    %c0_9 = arith.constant 0 : index
    %c0_10 = arith.constant 0 : index
    %10 = vector.load %arg5[%c0_9, %c0_10] : memref<1x128xf32, #tpu.memory_space<vmem>>, vector<1x128xf32>
    %11 = vector.broadcast %10 : vector<1x128xf32> to vector<8x128xf32>
    %12 = arith.addf %9, %11 : vector<8x128xf32>
    %c0_11 = arith.constant 0 : index
    %c0_12 = arith.constant 0 : index
    %13 = vector.load %arg6[%c0_11, %c0_12] : memref<8x128xf32, #tpu.memory_space<vmem>>, vector<8x128xf32>
    tpu.vector_store %arg6[%c0_11, %c0_12], %12 {strides = array<i32>} : memref<8x128xf32, #tpu.memory_space<vmem>>, vector<8x128xf32>,
    return
  }
  func.func @transform_0(%arg0: i32) -> (i32, i32) {
    %c0_i32 = arith.constant 0 : i32
    %c0_i32_0 = arith.constant 0 : i32
    return %arg0, %c0_i32 : i32, i32
  }
  func.func @transform_1(%arg0: i32) -> (i32, i32) {
    %c0_i32 = arith.constant 0 : i32
    %c0_i32_0 = arith.constant 0 : i32
    %c0_i32_1 = arith.constant 0 : i32
    return %c0_i32, %c0_i32_0 : i32, i32
  }
  func.func @transform_2(%arg0: i32) -> (i32, i32) {
    %c0_i32 = arith.constant 0 : i32
    %c0_i32_0 = arith.constant 0 : i32
    %c0_i32_1 = arith.constant 0 : i32
    return %c0_i32, %c0_i32_0 : i32, i32
  }
  func.func @transform_3(%arg0: i32) -> (i32, i32) {
    %c0_i32 = arith.constant 0 : i32
    %c0_i32_0 = arith.constant 0 : i32
    %c0_i32_1 = arith.constant 0 : i32
    return %c0_i32, %c0_i32_0 : i32, i32
  }
  func.func @transform_4(%arg0: i32) -> (i32, i32) {
    %c0_i32 = arith.constant 0 : i32
    %c0_i32_0 = arith.constant 0 : i32
    %c0_i32_1 = arith.constant 0 : i32
    return %c0_i32, %c0_i32_0 : i32, i32
  }
  func.func @transform_5(%arg0: i32) -> (i32, i32) {
    %c0_i32 = arith.constant 0 : i32
    %c0_i32_0 = arith.constant 0 : i32
    return %arg0, %c0_i32 : i32, i32
  }
}

</mosaic_0001>

<llo_original>
// kernel: net_forward.1
$region0: #{net_forward.1}
  #allocation0 [shape = 'u32[]', space=smem, size = 0x4, offset = 0x4, fixed_abs, tag = 'smem constant byte address 0x4 - core index']
  #allocation1 [shape = 'u32[144,128]{1,0:T(1,128)}', space=vmem, size = 0x12000, scoped, tag = 'internal scratch']
  %s0 = inlined_call_operand.hbm [shape: f32[8,784], index: 0, kind: input, shape index: {}]
  %s1 = inlined_call_operand.hbm [shape: f32[784,128], index: 1, kind: input, shape index: {}]
  %s2 = inlined_call_operand.vmem [shape: f32[1,128], index: 2, kind: input, shape index: {}]
  %s3 = inlined_call_operand.hbm [shape: f32[128,128], index: 3, kind: input, shape index: {}]
  %s4 = inlined_call_operand.vmem [shape: f32[1,128], index: 4, kind: input, shape index: {}]
  %s5 = inlined_call_operand.hbm [shape: f32[8,128], index: 5, kind: output, shape index: {}]
  %s6 = sld [smem:[#allocation0]]
  $region42: #{net_forward.1} parent=0
    _
  %s8 = ssub.s32 1, %s6
  %s9 = scalar_select 0, %s8, %s6
  $region1: #{net_forward.1} parent=0
    #allocation2 [shape = 'u8[28672]{0}', space=vmem, size = 0x7000, scoped, tag = 'input window, operand 0, single buffered']
    #allocation3 [shape = 's32[1]{0}', space=sflag, size = 0x4, scoped, tag = 'scoped memory for net_forward.1']
    #allocation4 [shape = 's32[1]{0}', space=sflag, size = 0x4, scoped, tag = 'scoped memory for net_forward.1']
    #allocation5 [shape = 'u8[401408]{0}', space=vmem, size = 0x62000, scoped, tag = 'input window, operand 1, single buffered']
    #allocation6 [shape = 's32[1]{0}', space=sflag, size = 0x4, scoped, tag = 'scoped memory for net_forward.1']
    #allocation7 [shape = 'u8[65536]{0}', space=vmem, size = 0x10000, scoped, tag = 'input window, operand 3, single buffered']
    #allocation8 [shape = 'u8[4096]{0}', space=vmem, size = 0x1000, scoped, tag = 'output window, operand 0, single buffered']
    %10 = vsyncpa [#allocation3], 0
    %11 = vsyncpa [#allocation6], 0
    %12 = vsyncpa [#allocation4], 0
    // Predicated region
    $region2: #{net_forward.1} parent=1 // pred_check
      _
    $region3: #{net_forward.1} parent=1 // pred_check_branch
      %14 = sbr.rel (0) target = $region5
    $region4: #{net_forward.1} parent=1 // pred_region
      %s16 = ssub.s32 896, 896
      %17 = vsyncadd [#allocation3], %s16
      %s19 = sshll.u32 [#allocation2], 4
      %s20 = int_to_ptr.vmem [resolvable:$true] %s19
      %22 = dma.hbm_to_vmem [thread:$0]  %s0, 896, %s20, [#allocation3]
    $region5: #{net_forward.1} parent=1 // pred_fallthru
      _
    // Predicated region
    $region6: #{net_forward.1} parent=1 // pred_check
      _
    $region7: #{net_forward.1} parent=1 // pred_check_branch
      %24 = sbr.rel (0) target = $region9
    $region8: #{net_forward.1} parent=1 // pred_region
      %s26 = ssub.s32 12544, 12544
      %27 = vsyncadd [#allocation6], %s26
      %s28 = sshll.u32 [#allocation5], 4
      %s29 = int_to_ptr.vmem [resolvable:$true] %s28
      %34 = dma.hbm_to_vmem [thread:$0]  %s1, 12544, %s29, [#allocation6], 128, 128, 8
    $region9: #{net_forward.1} parent=1 // pred_fallthru
      _
    // Predicated region
    $region10: #{net_forward.1} parent=1 // pred_check
      _
    $region11: #{net_forward.1} parent=1 // pred_check_branch
      %36 = sbr.rel (0) target = $region13
    $region12: #{net_forward.1} parent=1 // pred_region
      _
    $region13: #{net_forward.1} parent=1 // pred_fallthru
      _
    // Predicated region
    $region14: #{net_forward.1} parent=1 // pred_check
      _
    $region15: #{net_forward.1} parent=1 // pred_check_branch
      %38 = sbr.rel (0) target = $region17
    $region16: #{net_forward.1} parent=1 // pred_region
      %s40 = ssub.s32 2048, 2048
      %41 = vsyncadd [#allocation6], %s40
      %s42 = sshll.u32 [#allocation7], 4
      %s43 = int_to_ptr.vmem [resolvable:$true] %s42
      %48 = dma.hbm_to_vmem [thread:$0]  %s3, 2048, %s43, [#allocation6], 128, 128, 8
    $region17: #{net_forward.1} parent=1 // pred_fallthru
      _
    // Predicated region
    $region18: #{net_forward.1} parent=1 // pred_check
      _
    $region19: #{net_forward.1} parent=1 // pred_check_branch
      %50 = sbr.rel (0) target = $region21
    $region20: #{net_forward.1} parent=1 // pred_region
      _
    $region21: #{net_forward.1} parent=1 // pred_fallthru
      _
    // Predicated region
    $region22: #{net_forward.1} parent=1 // pred_check
      _
    $region23: #{net_forward.1} parent=1 // pred_check_branch
      %52 = sbr.rel (0) target = $region25
    $region24: #{net_forward.1} parent=1 // pred_region
      %53 = dma.done [#allocation3], 896
    $region25: #{net_forward.1} parent=1 // pred_fallthru
      _
    // Predicated region
    $region26: #{net_forward.1} parent=1 // pred_check
      _
    $region27: #{net_forward.1} parent=1 // pred_check_branch
      %55 = sbr.rel (0) target = $region29
    $region28: #{net_forward.1} parent=1 // pred_region
      %56 = dma.done [#allocation6], 12544
    $region29: #{net_forward.1} parent=1 // pred_fallthru
      _
    // Predicated region
    $region30: #{net_forward.1} parent=1 // pred_check
      _
    $region31: #{net_forward.1} parent=1 // pred_check_branch
      %58 = sbr.rel (0) target = $region33
    $region32: #{net_forward.1} parent=1 // pred_region
      %59 = dma.done [#allocation6], 2048
    $region33: #{net_forward.1} parent=1 // pred_fallthru
      _
    %v60 = vld [vmem:[#allocation2] sm:$0xff]
    %v61 = vld [vmem:[#allocation2 + $0x8] sm:$0xff]
    %v62 = vld [vmem:[#allocation2 + $0x10] sm:$0xff]
    %v63 = vld [vmem:[#allocation2 + $0x18] sm:$0xff]
    %v64 = vld [vmem:[#allocation2 + $0x20] sm:$0xff]
    %v65 = vld [vmem:[#allocation2 + $0x28] sm:$0xff]
    %v66 = vld [vmem:[#allocation2 + $0x30] sm:$0xff]
    %v67 = vld [vmem:[#allocation5] sm:$0xff]
    %v68 = vld [vmem:[#allocation5 + $0x8] sm:$0xff]
    %v69 = vld [vmem:[#allocation5 + $0x10] sm:$0xff]
    %v70 = vld [vmem:[#allocation5 + $0x18] sm:$0xff]
    %v71 = vld [vmem:[#allocation5 + $0x20] sm:$0xff]
    %v72 = vld [vmem:[#allocation5 + $0x28] sm:$0xff]
    %v73 = vld [vmem:[#allocation5 + $0x30] sm:$0xff]
    %v74 = vld [vmem:[#allocation5 + $0x38] sm:$0xff]
    %v75 = vld [vmem:[#allocation5 + $0x40] sm:$0xff]
    %v76 = vld [vmem:[#allocation5 + $0x48] sm:$0xff]
    %v77 = vld [vmem:[#allocation5 + $0x50] sm:$0xff]
    %v78 = vld [vmem:[#allocation5 + $0x58] sm:$0xff]
    %v79 = vld [vmem:[#allocation5 + $0x60] sm:$0xff]
    %v80 = vld [vmem:[#allocation5 + $0x68] sm:$0xff]
    %v81 = vld [vmem:[#allocation5 + $0x70] sm:$0xff]
    %v82 = vld [vmem:[#allocation5 + $0x78] sm:$0xff]
    %v83 = vld [vmem:[#allocation5 + $0x80] sm:$0xff]
    %v84 = vld [vmem:[#allocation5 + $0x88] sm:$0xff]
    %v85 = vld [vmem:[#allocation5 + $0x90] sm:$0xff]
    %v86 = vld [vmem:[#allocation5 + $0x98] sm:$0xff]
    %v87 = vld [vmem:[#allocation5 + $0xa0] sm:$0xff]
    %v88 = vld [vmem:[#allocation5 + $0xa8] sm:$0xff]
    %v89 = vld [vmem:[#allocation5 + $0xb0] sm:$0xff]
    %v90 = vld [vmem:[#allocation5 + $0xb8] sm:$0xff]
    %v91 = vld [vmem:[#allocation5 + $0xc0] sm:$0xff]
    %v92 = vld [vmem:[#allocation5 + $0xc8] sm:$0xff]
    %v93 = vld [vmem:[#allocation5 + $0xd0] sm:$0xff]
    %v94 = vld [vmem:[#allocation5 + $0xd8] sm:$0xff]
    %v95 = vld [vmem:[#allocation5 + $0xe0] sm:$0xff]
    %v96 = vld [vmem:[#allocation5 + $0xe8] sm:$0xff]
    %v97 = vld [vmem:[#allocation5 + $0xf0] sm:$0xff]
    %v98 = vld [vmem:[#allocation5 + $0xf8] sm:$0xff]
    %v99 = vld [vmem:[#allocation5 + $0x100] sm:$0xff]
    %v100 = vld [vmem:[#allocation5 + $0x108] sm:$0xff]
    %v101 = vld [vmem:[#allocation5 + $0x110] sm:$0xff]
    %v102 = vld [vmem:[#allocation5 + $0x118] sm:$0xff]
    %v103 = vld [vmem:[#allocation5 + $0x120] sm:$0xff]
    %v104 = vld [vmem:[#allocation5 + $0x128] sm:$0xff]
    %v105 = vld [vmem:[#allocation5 + $0x130] sm:$0xff]
    %v106 = vld [vmem:[#allocation5 + $0x138] sm:$0xff]
    %v107 = vld [vmem:[#allocation5 + $0x140] sm:$0xff]
    %v108 = vld [vmem:[#allocation5 + $0x148] sm:$0xff]
    %v109 = vld [vmem:[#allocation5 + $0x150] sm:$0xff]
    %v110 = vld [vmem:[#allocation5 + $0x158] sm:$0xff]
    %v111 = vld [vmem:[#allocation5 + $0x160] sm:$0xff]
    %v112 = vld [vmem:[#allocation5 + $0x168] sm:$0xff]
    %v113 = vld [vmem:[#allocation5 + $0x170] sm:$0xff]
    %v114 = vld [vmem:[#allocation5 + $0x178] sm:$0xff]
    %v115 = vld [vmem:[#allocation5 + $0x180] sm:$0xff]
    %v116 = vld [vmem:[#allocation5 + $0x188] sm:$0xff]
    %v117 = vld [vmem:[#allocation5 + $0x190] sm:$0xff]
    %v118 = vld [vmem:[#allocation5 + $0x198] sm:$0xff]
    %v119 = vld [vmem:[#allocation5 + $0x1a0] sm:$0xff]
    %v120 = vld [vmem:[#allocation5 + $0x1a8] sm:$0xff]
    %v121 = vld [vmem:[#allocation5 + $0x1b0] sm:$0xff]
    %v122 = vld [vmem:[#allocation5 + $0x1b8] sm:$0xff]
    %v123 = vld [vmem:[#allocation5 + $0x1c0] sm:$0xff]
    %v124 = vld [vmem:[#allocation5 + $0x1c8] sm:$0xff]
    %v125 = vld [vmem:[#allocation5 + $0x1d0] sm:$0xff]
    %v126 = vld [vmem:[#allocation5 + $0x1d8] sm:$0xff]
    %v127 = vld [vmem:[#allocation5 + $0x1e0] sm:$0xff]
    %v128 = vld [vmem:[#allocation5 + $0x1e8] sm:$0xff]
    %v129 = vld [vmem:[#allocation5 + $0x1f0] sm:$0xff]
    %v130 = vld [vmem:[#allocation5 + $0x1f8] sm:$0xff]
    %v131 = vld [vmem:[#allocation5 + $0x200] sm:$0xff]
    %v132 = vld [vmem:[#allocation5 + $0x208] sm:$0xff]
    %v133 = vld [vmem:[#allocation5 + $0x210] sm:$0xff]
    %v134 = vld [vmem:[#allocation5 + $0x218] sm:$0xff]
    %v135 = vld [vmem:[#allocation5 + $0x220] sm:$0xff]
    %v136 = vld [vmem:[#allocation5 + $0x228] sm:$0xff]
    %v137 = vld [vmem:[#allocation5 + $0x230] sm:$0xff]
    %v138 = vld [vmem:[#allocation5 + $0x238] sm:$0xff]
    %v139 = vld [vmem:[#allocation5 + $0x240] sm:$0xff]
    %v140 = vld [vmem:[#allocation5 + $0x248] sm:$0xff]
    %v141 = vld [vmem:[#allocation5 + $0x250] sm:$0xff]
    %v142 = vld [vmem:[#allocation5 + $0x258] sm:$0xff]
    %v143 = vld [vmem:[#allocation5 + $0x260] sm:$0xff]
    %v144 = vld [vmem:[#allocation5 + $0x268] sm:$0xff]
    %v145 = vld [vmem:[#allocation5 + $0x270] sm:$0xff]
    %v146 = vld [vmem:[#allocation5 + $0x278] sm:$0xff]
    %v147 = vld [vmem:[#allocation5 + $0x280] sm:$0xff]
    %v148 = vld [vmem:[#allocation5 + $0x288] sm:$0xff]
    %v149 = vld [vmem:[#allocation5 + $0x290] sm:$0xff]
    %v150 = vld [vmem:[#allocation5 + $0x298] sm:$0xff]
    %v151 = vld [vmem:[#allocation5 + $0x2a0] sm:$0xff]
    %v152 = vld [vmem:[#allocation5 + $0x2a8] sm:$0xff]
    %v153 = vld [vmem:[#allocation5 + $0x2b0] sm:$0xff]
    %v154 = vld [vmem:[#allocation5 + $0x2b8] sm:$0xff]
    %v155 = vld [vmem:[#allocation5 + $0x2c0] sm:$0xff]
    %v156 = vld [vmem:[#allocation5 + $0x2c8] sm:$0xff]
    %v157 = vld [vmem:[#allocation5 + $0x2d0] sm:$0xff]
    %v158 = vld [vmem:[#allocation5 + $0x2d8] sm:$0xff]
    %v159 = vld [vmem:[#allocation5 + $0x2e0] sm:$0xff]
    %v160 = vld [vmem:[#allocation5 + $0x2e8] sm:$0xff]
    %v161 = vld [vmem:[#allocation5 + $0x2f0] sm:$0xff]
    %v162 = vld [vmem:[#allocation5 + $0x2f8] sm:$0xff]
    %v163 = vld [vmem:[#allocation5 + $0x300] sm:$0xff]
    %v164 = vld [vmem:[#allocation5 + $0x308] sm:$0xff]
    %v165 = vld [vmem:[%s2] sm:$0x1]
    %v167 = vlaneseq
    %v168 = vshrl.u32 %v167, 7
    %v169 = vsub.s32 0, %v168
    %v170 = vrot.slane %v165, %v169
    %vm172 = vcmask 130048
    %v174 = vsel %vm172, %v66, 0
    %176 = vmatprep.subr.mxu0 0.0
    %177 = vmatpush1.msra.mxu0 %v67
    %178 = vmatprep.subr.mxu0 0.0
    %179 = vmatpush1.msra.mxu0 %v68
    %180 = vmatprep.subr.mxu0 0.0
    %181 = vmatpush1.msra.mxu0 %v69
    %182 = vmatprep.subr.mxu0 0.0
    %183 = vmatpush1.msra.mxu0 %v70
    %184 = vmatprep.subr.mxu0 0.0
    %185 = vmatpush1.msra.mxu0 %v71
    %186 = vmatprep.subr.mxu0 0.0
    %187 = vmatpush1.msra.mxu0 %v72
    %188 = vmatprep.subr.mxu0 0.0
    %189 = vmatpush1.msra.mxu0 %v73
    %190 = vmatprep.subr.mxu0 0.0
    %191 = vmatpush1.msra.mxu0 %v74
    %192 = vmatprep.subr.mxu0 0.0
    %193 = vmatpush1.msra.mxu0 %v75
    %194 = vmatprep.subr.mxu0 0.0
    %195 = vmatpush1.msra.mxu0 %v76
    %196 = vmatprep.subr.mxu0 0.0
    %197 = vmatpush1.msra.mxu0 %v77
    %198 = vmatprep.subr.mxu0 0.0
    %199 = vmatpush1.msra.mxu0 %v78
    %200 = vmatprep.subr.mxu0 0.0
    %201 = vmatpush1.msra.mxu0 %v79
    %202 = vmatprep.subr.mxu0 0.0
    %203 = vmatpush1.msra.mxu0 %v80
    %204 = vmatprep.subr.mxu0 0.0
    %205 = vmatpush1.msra.mxu0 %v81
    %206 = vmatprep.subr.mxu0 0.0
    %207 = vmatpush1.msra.mxu0 %v82
    %208 = vmatprep.subr.mxu0 0.0
    %209 = vmatpush1.msra.mxu0 %v83
    %210 = vmatprep.subr.mxu0 0.0
    %211 = vmatpush1.msra.mxu0 %v84
    %212 = vmatprep.subr.mxu0 0.0
    %213 = vmatpush1.msra.mxu0 %v85
    %214 = vmatprep.subr.mxu0 0.0
    %215 = vmatpush1.msra.mxu0 %v86
    %216 = vmatprep.subr.mxu0 0.0
    %217 = vmatpush1.msra.mxu0 %v87
    %218 = vmatprep.subr.mxu0 0.0
    %219 = vmatpush1.msra.mxu0 %v88
    %220 = vmatprep.subr.mxu0 0.0
    %221 = vmatpush1.msra.mxu0 %v89
    %222 = vmatprep.subr.mxu0 0.0
    %223 = vmatpush1.msra.mxu0 %v90
    %224 = vmatprep.subr.mxu0 0.0
    %225 = vmatpush1.msra.mxu0 %v91
    %226 = vmatprep.subr.mxu0 0.0
    %227 = vmatpush1.msra.mxu0 %v92
    %228 = vmatprep.subr.mxu0 0.0
    %229 = vmatpush1.msra.mxu0 %v93
    %230 = vmatprep.subr.mxu0 0.0
    %231 = vmatpush1.msra.mxu0 %v94
    %232 = vmatprep.subr.mxu0 0.0
    %233 = vmatpush1.msra.mxu0 %v95
    %234 = vmatprep.subr.mxu0 0.0
    %235 = vmatpush1.msra.mxu0 %v96
    %236 = vmatprep.subr.mxu0 0.0
    %237 = vmatpush1.msra.mxu0 %v97
    %238 = vmatprep.subr.mxu0 0.0
    %239 = vmatpush1.msra.mxu0 %v98
    %240 = vmatprep.mubr.f32.mxu0 %v61
    %241 = vmatmul.mubr.f32.gmra.mrb[0].mxu0 %v60
    %v242 = vpop.f32.mrb[0].mxu0
    %v243 = vadd.f32 %v170, %v242
    %v244 = vpop.f32.mrb[0].mxu0
    %245 = vdwg.mxu0
    %246 = vmatprep.subr.mxu0 0.0
    %247 = vmatpush1.msra.mxu0 %v99
    %248 = vmatprep.subr.mxu0 0.0
    %249 = vmatpush1.msra.mxu0 %v100
    %250 = vmatprep.subr.mxu0 0.0
    %251 = vmatpush1.msra.mxu0 %v101
    %252 = vmatprep.subr.mxu0 0.0
    %253 = vmatpush1.msra.mxu0 %v102
    %254 = vmatprep.subr.mxu0 0.0
    %255 = vmatpush1.msra.mxu0 %v103
    %256 = vmatprep.subr.mxu0 0.0
    %257 = vmatpush1.msra.mxu0 %v104
    %258 = vmatprep.subr.mxu0 0.0
    %259 = vmatpush1.msra.mxu0 %v105
    %260 = vmatprep.subr.mxu0 0.0
    %261 = vmatpush1.msra.mxu0 %v106
    %262 = vmatprep.subr.mxu0 0.0
    %263 = vmatpush1.msra.mxu0 %v107
    %264 = vmatprep.subr.mxu0 0.0
    %265 = vmatpush1.msra.mxu0 %v108
    %266 = vmatprep.subr.mxu0 0.0
    %267 = vmatpush1.msra.mxu0 %v109
    %268 = vmatprep.subr.mxu0 0.0
    %269 = vmatpush1.msra.mxu0 %v110
    %270 = vmatprep.subr.mxu0 0.0
    %271 = vmatpush1.msra.mxu0 %v111
    %272 = vmatprep.subr.mxu0 0.0
    %273 = vmatpush1.msra.mxu0 %v112
    %274 = vmatprep.subr.mxu0 0.0
    %275 = vmatpush1.msra.mxu0 %v113
    %276 = vmatprep.subr.mxu0 0.0
    %277 = vmatpush1.msra.mxu0 %v114
    %278 = vmatprep.subr.mxu0 0.0
    %279 = vmatpush1.msra.mxu0 %v115
    %280 = vmatprep.subr.mxu0 0.0
    %281 = vmatpush1.msra.mxu0 %v116
    %282 = vmatprep.subr.mxu0 0.0
    %283 = vmatpush1.msra.mxu0 %v117
    %284 = vmatprep.subr.mxu0 0.0
    %285 = vmatpush1.msra.mxu0 %v118
    %286 = vmatprep.subr.mxu0 0.0
    %287 = vmatpush1.msra.mxu0 %v119
    %288 = vmatprep.subr.mxu0 0.0
    %289 = vmatpush1.msra.mxu0 %v120
    %290 = vmatprep.subr.mxu0 0.0
    %291 = vmatpush1.msra.mxu0 %v121
    %292 = vmatprep.subr.mxu0 0.0
    %293 = vmatpush1.msra.mxu0 %v122
    %294 = vmatprep.subr.mxu0 0.0
    %295 = vmatpush1.msra.mxu0 %v123
    %296 = vmatprep.subr.mxu0 0.0
    %297 = vmatpush1.msra.mxu0 %v124
    %298 = vmatprep.subr.mxu0 0.0
    %299 = vmatpush1.msra.mxu0 %v125
    %300 = vmatprep.subr.mxu0 0.0
    %301 = vmatpush1.msra.mxu0 %v126
    %302 = vmatprep.subr.mxu0 0.0
    %303 = vmatpush1.msra.mxu0 %v127
    %304 = vmatprep.subr.mxu0 0.0
    %305 = vmatpush1.msra.mxu0 %v128
    %306 = vmatprep.subr.mxu0 0.0
    %307 = vmatpush1.msra.mxu0 %v129
    %308 = vmatprep.subr.mxu0 0.0
    %309 = vmatpush1.msra.mxu0 %v130
    %310 = vmatprep.mubr.f32.mxu0 %v63
    %311 = vmatmul.mubr.f32.gmra.mrb[0].mxu0 %v62
    %v312 = vpop.f32.mrb[0].mxu0
    %v313 = vadd.f32 %v243, %v312
    %v314 = vpop.f32.mrb[0].mxu0
    %315 = vdwg.mxu0
    %316 = vmatprep.subr.mxu0 0.0
    %317 = vmatpush1.msra.mxu0 %v131
    %318 = vmatprep.subr.mxu0 0.0
    %319 = vmatpush1.msra.mxu0 %v132
    %320 = vmatprep.subr.mxu0 0.0
    %321 = vmatpush1.msra.mxu0 %v133
    %322 = vmatprep.subr.mxu0 0.0
    %323 = vmatpush1.msra.mxu0 %v134
    %324 = vmatprep.subr.mxu0 0.0
    %325 = vmatpush1.msra.mxu0 %v135
    %326 = vmatprep.subr.mxu0 0.0
    %327 = vmatpush1.msra.mxu0 %v136
    %328 = vmatprep.subr.mxu0 0.0
    %329 = vmatpush1.msra.mxu0 %v137
    %330 = vmatprep.subr.mxu0 0.0
    %331 = vmatpush1.msra.mxu0 %v138
    %332 = vmatprep.subr.mxu0 0.0
    %333 = vmatpush1.msra.mxu0 %v139
    %334 = vmatprep.subr.mxu0 0.0
    %335 = vmatpush1.msra.mxu0 %v140
    %336 = vmatprep.subr.mxu0 0.0
    %337 = vmatpush1.msra.mxu0 %v141
    %338 = vmatprep.subr.mxu0 0.0
    %339 = vmatpush1.msra.mxu0 %v142
    %340 = vmatprep.subr.mxu0 0.0
    %341 = vmatpush1.msra.mxu0 %v143
    %342 = vmatprep.subr.mxu0 0.0
    %343 = vmatpush1.msra.mxu0 %v144
    %344 = vmatprep.subr.mxu0 0.0
    %345 = vmatpush1.msra.mxu0 %v145
    %346 = vmatprep.subr.mxu0 0.0
    %347 = vmatpush1.msra.mxu0 %v146
    %348 = vmatprep.subr.mxu0 0.0
    %349 = vmatpush1.msra.mxu0 %v147
    %350 = vmatprep.subr.mxu0 0.0
    %351 = vmatpush1.msra.mxu0 %v148
    %352 = vmatprep.subr.mxu0 0.0
    %353 = vmatpush1.msra.mxu0 %v149
    %354 = vmatprep.subr.mxu0 0.0
    %355 = vmatpush1.msra.mxu0 %v150
    %356 = vmatprep.subr.mxu0 0.0
    %357 = vmatpush1.msra.mxu0 %v151
    %358 = vmatprep.subr.mxu0 0.0
    %359 = vmatpush1.msra.mxu0 %v152
    %360 = vmatprep.subr.mxu0 0.0
    %361 = vmatpush1.msra.mxu0 %v153
    %362 = vmatprep.subr.mxu0 0.0
    %363 = vmatpush1.msra.mxu0 %v154
    %364 = vmatprep.subr.mxu0 0.0
    %365 = vmatpush1.msra.mxu0 %v155
    %366 = vmatprep.subr.mxu0 0.0
    %367 = vmatpush1.msra.mxu0 %v156
    %368 = vmatprep.subr.mxu0 0.0
    %369 = vmatpush1.msra.mxu0 %v157
    %370 = vmatprep.subr.mxu0 0.0
    %371 = vmatpush1.msra.mxu0 %v158
    %372 = vmatprep.subr.mxu0 0.0
    %373 = vmatpush1.msra.mxu0 %v159
    %374 = vmatprep.subr.mxu0 0.0
    %375 = vmatpush1.msra.mxu0 %v160
    %376 = vmatprep.subr.mxu0 0.0
    %377 = vmatpush1.msra.mxu0 %v161
    %378 = vmatprep.subr.mxu0 0.0
    %379 = vmatpush1.msra.mxu0 %v162
    %380 = vmatprep.mubr.f32.mxu0 %v65
    %381 = vmatmul.mubr.f32.gmra.mrb[0].mxu0 %v64
    %v382 = vpop.f32.mrb[0].mxu0
    %v383 = vadd.f32 %v313, %v382
    %v384 = vpop.f32.mrb[0].mxu0
    %385 = vdwg.mxu0
    %386 = vmatprep.subr.mxu0 0.0
    %387 = vmatpush1.msra.mxu0 %v163
    %388 = vmatprep.subr.mxu0 0.0
    %389 = vmatpush1.msra.mxu0 %v164
    %390 = vmatprep.subr.mxu0 0.0
    %391 = vmatpush1.msra.mxu0 0.0
    %392 = vmatprep.subr.mxu0 0.0
    %393 = vmatpush1.msra.mxu0 0.0
    %394 = vmatprep.subr.mxu0 0.0
    %395 = vmatpush1.msra.mxu0 0.0
    %396 = vmatprep.subr.mxu0 0.0
    %397 = vmatpush1.msra.mxu0 0.0
    %398 = vmatprep.subr.mxu0 0.0
    %399 = vmatpush1.msra.mxu0 0.0
    %400 = vmatprep.subr.mxu0 0.0
    %401 = vmatpush1.msra.mxu0 0.0
    %402 = vmatprep.subr.mxu0 0.0
    %403 = vmatpush1.msra.mxu0 0.0
    %404 = vmatprep.subr.mxu0 0.0
    %405 = vmatpush1.msra.mxu0 0.0
    %406 = vmatprep.subr.mxu0 0.0
    %407 = vmatpush1.msra.mxu0 0.0
    %408 = vmatprep.subr.mxu0 0.0
    %409 = vmatpush1.msra.mxu0 0.0
    %410 = vmatprep.subr.mxu0 0.0
    %411 = vmatpush1.msra.mxu0 0.0
    %412 = vmatprep.subr.mxu0 0.0
    %413 = vmatpush1.msra.mxu0 0.0
    %414 = vmatprep.subr.mxu0 0.0
    %415 = vmatpush1.msra.mxu0 0.0
    %416 = vmatprep.subr.mxu0 0.0
    %417 = vmatpush1.msra.mxu0 0.0
    %418 = vmatprep.subr.mxu0 0.0
    %419 = vmatpush1.msra.mxu0 0.0
    %420 = vmatprep.subr.mxu0 0.0
    %421 = vmatpush1.msra.mxu0 0.0
    %422 = vmatprep.subr.mxu0 0.0
    %423 = vmatpush1.msra.mxu0 0.0
    %424 = vmatprep.subr.mxu0 0.0
    %425 = vmatpush1.msra.mxu0 0.0
    %426 = vmatprep.subr.mxu0 0.0
    %427 = vmatpush1.msra.mxu0 0.0
    %428 = vmatprep.subr.mxu0 0.0
    %429 = vmatpush1.msra.mxu0 0.0
    %430 = vmatprep.subr.mxu0 0.0
    %431 = vmatpush1.msra.mxu0 0.0
    %432 = vmatprep.subr.mxu0 0.0
    %433 = vmatpush1.msra.mxu0 0.0
    %434 = vmatprep.subr.mxu0 0.0
    %435 = vmatpush1.msra.mxu0 0.0
    %436 = vmatprep.subr.mxu0 0.0
    %437 = vmatpush1.msra.mxu0 0.0
    %438 = vmatprep.subr.mxu0 0.0
    %439 = vmatpush1.msra.mxu0 0.0
    %440 = vmatprep.subr.mxu0 0.0
    %441 = vmatpush1.msra.mxu0 0.0
    %442 = vmatprep.subr.mxu0 0.0
    %443 = vmatpush1.msra.mxu0 0.0
    %444 = vmatprep.subr.mxu0 0.0
    %445 = vmatpush1.msra.mxu0 0.0
    %446 = vmatprep.subr.mxu0 0.0
    %447 = vmatpush1.msra.mxu0 0.0
    %448 = vmatprep.subr.mxu0 0.0
    %449 = vmatpush1.msra.mxu0 0.0
    %450 = vmatprep.mubr.f32.mxu0 0.0
    %451 = vmatmul.mubr.f32.gmra.mrb[0].mxu0 %v174
    %v452 = vpop.f32.mrb[0].mxu0
    %v453 = vadd.f32 %v383, %v452
    %v454 = vpop.f32.mrb[0].mxu0
    %455 = vdwg.mxu0
    %v456 = vmax.f32 %v453, 0.0
    %v457 = vld [vmem:[#allocation7] sm:$0xff]
    %v458 = vld [vmem:[#allocation7 + $0x8] sm:$0xff]
    %v459 = vld [vmem:[#allocation7 + $0x10] sm:$0xff]
    %v460 = vld [vmem:[#allocation7 + $0x18] sm:$0xff]
    %v461 = vld [vmem:[#allocation7 + $0x20] sm:$0xff]
    %v462 = vld [vmem:[#allocation7 + $0x28] sm:$0xff]
    %v463 = vld [vmem:[#allocation7 + $0x30] sm:$0xff]
    %v464 = vld [vmem:[#allocation7 + $0x38] sm:$0xff]
    %v465 = vld [vmem:[#allocation7 + $0x40] sm:$0xff]
    %v466 = vld [vmem:[#allocation7 + $0x48] sm:$0xff]
    %v467 = vld [vmem:[#allocation7 + $0x50] sm:$0xff]
    %v468 = vld [vmem:[#allocation7 + $0x58] sm:$0xff]
    %v469 = vld [vmem:[#allocation7 + $0x60] sm:$0xff]
    %v470 = vld [vmem:[#allocation7 + $0x68] sm:$0xff]
    %v471 = vld [vmem:[#allocation7 + $0x70] sm:$0xff]
    %v472 = vld [vmem:[#allocation7 + $0x78] sm:$0xff]
    %v473 = vld [vmem:[%s4] sm:$0x1]
    %v475 = vlaneseq
    %v476 = vshrl.u32 %v475, 7
    %v477 = vsub.s32 0, %v476
    %v478 = vrot.slane %v473, %v477
    %480 = vmatprep.subr.mxu0 0.0
    %481 = vmatpush1.msra.mxu0 %v457
    %482 = vmatprep.subr.mxu0 0.0
    %483 = vmatpush1.msra.mxu0 %v458
    %484 = vmatprep.subr.mxu0 0.0
    %485 = vmatpush1.msra.mxu0 %v459
    %486 = vmatprep.subr.mxu0 0.0
    %487 = vmatpush1.msra.mxu0 %v460
    %488 = vmatprep.subr.mxu0 0.0
    %489 = vmatpush1.msra.mxu0 %v461
    %490 = vmatprep.subr.mxu0 0.0
    %491 = vmatpush1.msra.mxu0 %v462
    %492 = vmatprep.subr.mxu0 0.0
    %493 = vmatpush1.msra.mxu0 %v463
    %494 = vmatprep.subr.mxu0 0.0
    %495 = vmatpush1.msra.mxu0 %v464
    %496 = vmatprep.subr.mxu0 0.0
    %497 = vmatpush1.msra.mxu0 %v465
    %498 = vmatprep.subr.mxu0 0.0
    %499 = vmatpush1.msra.mxu0 %v466
    %500 = vmatprep.subr.mxu0 0.0
    %501 = vmatpush1.msra.mxu0 %v467
    %502 = vmatprep.subr.mxu0 0.0
    %503 = vmatpush1.msra.mxu0 %v468
    %504 = vmatprep.subr.mxu0 0.0
    %505 = vmatpush1.msra.mxu0 %v469
    %506 = vmatprep.subr.mxu0 0.0
    %507 = vmatpush1.msra.mxu0 %v470
    %508 = vmatprep.subr.mxu0 0.0
    %509 = vmatpush1.msra.mxu0 %v471
    %510 = vmatprep.subr.mxu0 0.0
    %511 = vmatpush1.msra.mxu0 %v472
    %512 = vmatprep.subr.mxu0 0.0
    %513 = vmatpush1.msra.mxu0 0.0
    %514 = vmatprep.subr.mxu0 0.0
    %515 = vmatpush1.msra.mxu0 0.0
    %516 = vmatprep.subr.mxu0 0.0
    %517 = vmatpush1.msra.mxu0 0.0
    %518 = vmatprep.subr.mxu0 0.0
    %519 = vmatpush1.msra.mxu0 0.0
    %520 = vmatprep.subr.mxu0 0.0
    %521 = vmatpush1.msra.mxu0 0.0
    %522 = vmatprep.subr.mxu0 0.0
    %523 = vmatpush1.msra.mxu0 0.0
    %524 = vmatprep.subr.mxu0 0.0
    %525 = vmatpush1.msra.mxu0 0.0
    %526 = vmatprep.subr.mxu0 0.0
    %527 = vmatpush1.msra.mxu0 0.0
    %528 = vmatprep.subr.mxu0 0.0
    %529 = vmatpush1.msra.mxu0 0.0
    %530 = vmatprep.subr.mxu0 0.0
    %531 = vmatpush1.msra.mxu0 0.0
    %532 = vmatprep.subr.mxu0 0.0
    %533 = vmatpush1.msra.mxu0 0.0
    %534 = vmatprep.subr.mxu0 0.0
    %535 = vmatpush1.msra.mxu0 0.0
    %536 = vmatprep.subr.mxu0 0.0
    %537 = vmatpush1.msra.mxu0 0.0
    %538 = vmatprep.subr.mxu0 0.0
    %539 = vmatpush1.msra.mxu0 0.0
    %540 = vmatprep.subr.mxu0 0.0
    %541 = vmatpush1.msra.mxu0 0.0
    %542 = vmatprep.subr.mxu0 0.0
    %543 = vmatpush1.msra.mxu0 0.0
    %544 = vmatprep.mubr.f32.mxu0 0.0
    %545 = vmatmul.mubr.f32.gmra.mrb[0].mxu0 %v456
    %v546 = vpop.f32.mrb[0].mxu0
    %v547 = vadd.f32 %v478, %v546
    %v548 = vpop.f32.mrb[0].mxu0
    %549 = vdwg.mxu0
    %550 = vst [vmem:[#allocation8] sm:$0xff] %v547
    // Predicated region
    $region34: #{net_forward.1} parent=1 // pred_check
      _
    $region35: #{net_forward.1} parent=1 // pred_check_branch
      %552 = sbr.rel (0) target = $region37
    $region36: #{net_forward.1} parent=1 // pred_region
      %s554 = ssub.s32 128, 128
      %555 = vsyncadd [#allocation4], %s554
      %s557 = sshll.u32 [#allocation8], 4
      %s558 = int_to_ptr.vmem [resolvable:$true] %s557
      %560 = dma.vmem_to_hbm [thread:$0]  %s558, 128, %s5, [#allocation4]
    $region37: #{net_forward.1} parent=1 // pred_fallthru
      _
    // Predicated region
    $region38: #{net_forward.1} parent=1 // pred_check
      _
    $region39: #{net_forward.1} parent=1 // pred_check_branch
      %562 = sbr.rel (0) target = $region41
    $region40: #{net_forward.1} parent=1 // pred_region
      %563 = dma.done [#allocation4], 128
    $region41: #{net_forward.1} parent=1 // pred_fallthru
      _
    %564 = vsyncpa [#allocation3], 1
    %565 = vsyncpa [#allocation6], 1
    %566 = vsyncpa [#allocation4], 1

</llo_original>
